<compile_context>
chip_gen: v6e
topology: v6e:2x2x1
jax: 0.10.0
libtpu: 0.0.40
codegen_flags: <defaults>
</compile_context>

<pallas_src>
import math

import jax
import jax.numpy as jnp
import numpy as np
from jax.experimental import pallas as pl
from jax.experimental.pallas import tpu as pltpu


def _round_up(x, m):
    return ((x + m - 1) // m) * m


# ----------------------------- Pallas kernel ------------------------------ #
def _spectrum_kernel(x_ref, w_ref, o_ref):
    # x_ref : (TM, W)      row tile of frames (compute dtype)
    # w_ref : (W, Npad)    fused [re | im] x (freq, channel) windowed-DFT weights
    # o_ref : (TM, Npad)   f32 output slab (lane-dense, multiple of 128)
    o_ref[...] = jnp.dot(x_ref[...], w_ref[...],
                         preferred_element_type=jnp.float32)


def spectrum_pallas(frames, w_fused, *, n_channels, n_freqs, compute_dtype,
                    tile_m=1024):
    """frames: (B, F, W) f32; w_fused: (W, Npad) -> (B, F, K, C) complex64."""
    B, F, W = frames.shape
    C, K = n_channels, n_freqs
    Npad = w_fused.shape[1]
    M = B * F

    x = frames.reshape(M, W).astype(compute_dtype)

    # Tile rows so VMEM stays bounded regardless of M.  With TM=1024,
    # Npad=256: 2 x-buffers (bf16) + 2 out-buffers (f32) + resident weights
    # is ~2.3 MiB, far inside v7x's 64 MiB physical VMEM.
    TM = min(tile_m, _round_up(M, 8))
    Mpad = _round_up(M, TM)
    if Mpad != M:
        x = jnp.pad(x, ((0, Mpad - M), (0, 0)))

    out = pl.pallas_call(
        _spectrum_kernel,
        out_shape=jax.ShapeDtypeStruct((Mpad, Npad), jnp.float32),
        grid_spec=pltpu.PrefetchScalarGridSpec(
            num_scalar_prefetch=0,
            grid=(Mpad // TM,),
            in_specs=[
                pl.BlockSpec((TM, W), lambda i: (i, 0)),
                # Whole fused weight bank is tiny; constant block index keeps
                # it resident (fetched once, no per-step re-DMA).
                pl.BlockSpec((W, Npad), lambda i: (0, 0)),
            ],
            out_specs=pl.BlockSpec((TM, Npad), lambda i: (i, 0)),
        ),
        compiler_params=pltpu.CompilerParams(
            dimension_semantics=("parallel",)),
    )(x, w_fused)

    out = out[:M]
    CK = C * K
    # Column layout was built as (K, C)-major, so these reshapes already give
    # the module's (B, F, K, C) layout -- no transpose needed here.
    out_re = out[:, :CK].reshape(B, F, K, C)
    out_im = out[:, CK:2 * CK].reshape(B, F, K, C)
    return jax.lax.complex(out_re, out_im)


# --------------------------- parameter / glue ------------------------------ #
def make_windows(window_size, n_extra_wins):
    """Hann window + GaussianWindows.get() with the module's deterministic init."""
    W = window_size
    n = jnp.arange(W, dtype=jnp.float32)
    # torch.hann_window default is periodic: 0.5 - 0.5*cos(2*pi*n/W)
    hann = 0.5 - 0.5 * jnp.cos(2.0 * math.pi * n / W)
    wins = [hann[None, :]]
    if n_extra_wins > 0:
        nE = n_extra_wins
        # GaussianWindows.__init__: sigma = -ones(n), center = logit(arange(1,n+1)/(n+1))
        sigma_param = -jnp.ones((nE,), jnp.float32)
        p = jnp.arange(1, nE + 1, dtype=jnp.float32) / (nE + 1)
        center_param = jnp.log(p / (1.0 - p))  # logit
        sigma = jax.nn.sigmoid(sigma_param)
        center = jax.nn.sigmoid(center_param)
        x = jnp.arange(W, dtype=jnp.float32)
        Y = jnp.exp(
            -0.5 * ((x[:, None] - W * center[None, :]) /
                    (sigma[None, :] * W / 2.0)) ** 2
        )  # (W, nE)
        wins.append(Y.T)  # (nE, W) — matches torch.cat([win[None], Y.t()], 0)
    return jnp.concatenate(wins, axis=0)  # (C, W)


def make_fused_dft_weights(wins, compute_dtype):
    """Fold windows into one fused ortho-rfft matrix (W, Npad).

    Column layout: [re(k0c0, k0c1, ..., kK-1,cC-1), im(...)], i.e. (K, C)-major,
    zero-padded so Npad is a multiple of 128 lanes (unmasked wide stores).
    This ordering lets the wrapper reshape directly to (B, F, K, C).
    """
    C, W = wins.shape
    K = W // 2 + 1
    t = jnp.arange(W, dtype=jnp.float32)[:, None]
    k = jnp.arange(K, dtype=jnp.float32)[None, :]
    ang = 2.0 * math.pi * t * k / W
    scale = 1.0 / math.sqrt(W)             # norm='ortho'
    cos_m = jnp.cos(ang) * scale            # (W, K)
    sin_m = -jnp.sin(ang) * scale           # rfft: exp(-i*ang) => imag = -sin
    w_re = wins[:, :, None] * cos_m[None]   # (C, W, K)
    w_im = wins[:, :, None] * sin_m[None]
    # (C, W, K) -> (W, K, C) -> (W, K*C): (K, C)-major columns.
    w_re = jnp.transpose(w_re, (1, 2, 0)).reshape(W, K * C)
    w_im = jnp.transpose(w_im, (1, 2, 0)).reshape(W, K * C)
    w = jnp.concatenate([w_re, w_im], axis=1)   # (W, 2*C*K)
    n_pad = _round_up(2 * C * K, 128) - 2 * C * K
    if n_pad:
        w = jnp.pad(w, ((0, 0), (0, n_pad)))
    return w.astype(compute_dtype)


def make_spectrum(window_size, n_extra_wins, compute_dtype=jnp.bfloat16):
    """Builds weights ONCE and returns a jitted forward(frames) -> (B,F,K,C) c64."""
    # TODO(synk): log=True branch (complex(abs, angle)) not implemented; the
    # module default is log=False, which is what we reproduce here.
    C = n_extra_wins + 1
    K = window_size // 2 + 1
    wins = make_windows(window_size, n_extra_wins)
    w_fused = make_fused_dft_weights(wins, compute_dtype)

    @jax.jit
    def forward(frames):
        return spectrum_pallas(frames, w_fused, n_channels=C, n_freqs=K,
                               compute_dtype=compute_dtype)

    return forward


# -------------------------------- main ------------------------------------ #
if __name__ == "__main__":
    window_size = 64
    n_extra_wins = 2                 # nChannel = 3
    B, F = 2, 8                      # frames: (batch, nFrames, windowSize)
    K, C = window_size // 2 + 1, n_extra_wins + 1

    key = jax.random.PRNGKey(0)
    frames = jax.random.normal(key, (B, F, window_size), dtype=jnp.float32)

    # pure-JAX / FFT reference of the PyTorch forward
    wins = make_windows(window_size, n_extra_wins)                  # (C, W)
    ref = jnp.fft.rfft(frames[:, :, None, :] * wins[None, None], norm="ortho")
    ref = jnp.swapaxes(ref, -1, -2)                                 # (B, F, K, C)

    # Exact f32 path.
    fwd_f32 = make_spectrum(window_size, n_extra_wins, compute_dtype=jnp.float32)
    out = jax.block_until_ready(fwd_f32(frames))
    assert out.shape == (B, F, K, C)
    np.testing.assert_allclose(np.asarray(out), np.asarray(ref),
                               rtol=1e-3, atol=1e-3)

    # Fast bf16 MXU path (recommended on v6e/v7x); f32 accumulation.
    fwd_bf16 = make_spectrum(window_size, n_extra_wins, compute_dtype=jnp.bfloat16)
    out_fast = jax.block_until_ready(fwd_bf16(frames))
    assert out_fast.shape == (B, F, K, C)
    np.testing.assert_allclose(np.asarray(out_fast), np.asarray(ref),
                               rtol=5e-2, atol=5e-2)

    print("KERNEL_OK")
</pallas_src>

<mosaic_0001>
module attributes {stable_mosaic.version = 11 : i64} {
  func.func @_spectrum_kernel(%arg0: i32, %arg1: memref<16x64xf32, #tpu.memory_space<vmem>>, %arg2: memref<64x256xf32, #tpu.memory_space<vmem>>, %arg3: memref<16x256xf32, #tpu.memory_space<vmem>>) attributes {dimension_semantics = [#tpu.dimension_semantics<parallel>], iteration_bounds = array<i64: 1>, scalar_prefetch = 0 : i64, scratch_operands = 0 : i64, tpu.core_type = #tpu.core_type<tc>, window_params = [{transform_indices = @transform_0, window_bounds = array<i64: 16, 64>}, {pipeline_mode = #tpu.pipeline_mode<synchronous>, transform_indices = @transform_1, window_bounds = array<i64: 64, 256>}, {transform_indices = @transform_2, window_bounds = array<i64: 16, 256>}]} {
    %c0 = arith.constant 0 : index
    %c0_0 = arith.constant 0 : index
    %0 = vector.load %arg1[%c0, %c0_0] : memref<16x64xf32, #tpu.memory_space<vmem>>, vector<16x64xf32>
    %c0_1 = arith.constant 0 : index
    %c0_2 = arith.constant 0 : index
    %1 = vector.load %arg2[%c0_1, %c0_2] : memref<64x256xf32, #tpu.memory_space<vmem>>, vector<64x256xf32>
    %cst = arith.constant dense<0.000000e+00> : vector<16x256xf32>
    %2 = tpu.matmul %0, %1, %cst {dimension_numbers = #tpu.dot_dimension_numbers<[1], [0], [0], [1], [0, 0, 1, 1], [], []>} : vector<16x64xf32>, vector<64x256xf32>, vector<16x256xf32> -> vector<16x256xf32>
    %c0_3 = arith.constant 0 : index
    %c0_4 = arith.constant 0 : index
    %3 = vector.load %arg3[%c0_3, %c0_4] : memref<16x256xf32, #tpu.memory_space<vmem>>, vector<16x256xf32>
    tpu.vector_store %arg3[%c0_3, %c0_4], %2 {strides = array<i32>} : memref<16x256xf32, #tpu.memory_space<vmem>>, vector<16x256xf32>,
    return
  }
  func.func @transform_0(%arg0: i32) -> (i32, i32) {
    %c0_i32 = arith.constant 0 : i32
    %c0_i32_0 = arith.constant 0 : i32
    return %arg0, %c0_i32 : i32, i32
  }
  func.func @transform_1(%arg0: i32) -> (i32, i32) {
    %c0_i32 = arith.constant 0 : i32
    %c0_i32_0 = arith.constant 0 : i32
    %c0_i32_1 = arith.constant 0 : i32
    return %c0_i32, %c0_i32_0 : i32, i32
  }
  func.func @transform_2(%arg0: i32) -> (i32, i32) {
    %c0_i32 = arith.constant 0 : i32
    %c0_i32_0 = arith.constant 0 : i32
    return %arg0, %c0_i32 : i32, i32
  }
}

</mosaic_0001>

<llo_original>
// kernel: custom-call
$region0: #{custom-call}
  %s0 = inlined_call_operand.vmem [shape: f32[2,8,33,3], index: 0, kind: input, shape index: {}]
  %s1 = inlined_call_operand.vmem [shape: f32[2,8,33,3], index: 1, kind: input, shape index: {}]
  %s2 = inlined_call_operand.vmem [shape: c64[2,8,33,3], index: 2, kind: output, shape index: {}]
  %s4 = scalar_lea.vmem %s2, 198
  %v5 = vld [vmem:[%s0] sm:$0xff]
  %6 = vst [vmem:[%s2] sm:$0xff] %v5
  %s7 = scalar_lea.vmem %s2, 8
  %s8 = scalar_lea.vmem %s0, 8
  %v9 = vld [vmem:[%s8] sm:$0xff]
  %10 = vst [vmem:[%s7] sm:$0xff] %v9
  %s11 = scalar_lea.vmem %s2, 16
  %s12 = scalar_lea.vmem %s0, 16
  %v13 = vld [vmem:[%s12] sm:$0xff]
  %14 = vst [vmem:[%s11] sm:$0xff] %v13
  %s15 = scalar_lea.vmem %s2, 24
  %s16 = scalar_lea.vmem %s0, 24
  %v17 = vld [vmem:[%s16] sm:$0xff]
  %18 = vst [vmem:[%s15] sm:$0xff] %v17
  %s19 = scalar_lea.vmem %s2, 32
  %s20 = scalar_lea.vmem %s0, 32
  %v21 = vld [vmem:[%s20] sm:$0xff]
  %22 = vst [vmem:[%s19] sm:$0xff] %v21
  %s23 = scalar_lea.vmem %s2, 40
  %s24 = scalar_lea.vmem %s0, 40
  %v25 = vld [vmem:[%s24] sm:$0xff]
  %26 = vst [vmem:[%s23] sm:$0xff] %v25
  %s27 = scalar_lea.vmem %s2, 48
  %s28 = scalar_lea.vmem %s0, 48
  %v29 = vld [vmem:[%s28] sm:$0xff]
  %30 = vst [vmem:[%s27] sm:$0xff] %v29
  %s31 = scalar_lea.vmem %s2, 56
  %s32 = scalar_lea.vmem %s0, 56
  %v33 = vld [vmem:[%s32] sm:$0xff]
  %34 = vst [vmem:[%s31] sm:$0xff] %v33
  %s35 = scalar_lea.vmem %s2, 64
  %s36 = scalar_lea.vmem %s0, 64
  %v37 = vld [vmem:[%s36] sm:$0xff]
  %38 = vst [vmem:[%s35] sm:$0xff] %v37
  %s39 = scalar_lea.vmem %s2, 72
  %s40 = scalar_lea.vmem %s0, 72
  %v41 = vld [vmem:[%s40] sm:$0xff]
  %42 = vst [vmem:[%s39] sm:$0xff] %v41
  %s43 = scalar_lea.vmem %s2, 80
  %s44 = scalar_lea.vmem %s0, 80
  %v45 = vld [vmem:[%s44] sm:$0xff]
  %46 = vst [vmem:[%s43] sm:$0xff] %v45
  %s47 = scalar_lea.vmem %s2, 88
  %s48 = scalar_lea.vmem %s0, 88
  %v49 = vld [vmem:[%s48] sm:$0xff]
  %50 = vst [vmem:[%s47] sm:$0xff] %v49
  %s51 = scalar_lea.vmem %s2, 96
  %s52 = scalar_lea.vmem %s0, 96
  %v53 = vld [vmem:[%s52] sm:$0xff]
  %54 = vst [vmem:[%s51] sm:$0xff] %v53
  %s55 = scalar_lea.vmem %s2, 104
  %s56 = scalar_lea.vmem %s0, 104
  %v57 = vld [vmem:[%s56] sm:$0xff]
  %58 = vst [vmem:[%s55] sm:$0xff] %v57
  %s59 = scalar_lea.vmem %s2, 112
  %s60 = scalar_lea.vmem %s0, 112
  %v61 = vld [vmem:[%s60] sm:$0xff]
  %62 = vst [vmem:[%s59] sm:$0xff] %v61
  %s63 = scalar_lea.vmem %s2, 120
  %s64 = scalar_lea.vmem %s0, 120
  %v65 = vld [vmem:[%s64] sm:$0xff]
  %66 = vst [vmem:[%s63] sm:$0xff] %v65
  %s67 = scalar_lea.vmem %s2, 128
  %s68 = scalar_lea.vmem %s0, 128
  %v69 = vld [vmem:[%s68] sm:$0xff]
  %70 = vst [vmem:[%s67] sm:$0xff] %v69
  %s71 = scalar_lea.vmem %s2, 136
  %s72 = scalar_lea.vmem %s0, 136
  %v73 = vld [vmem:[%s72] sm:$0xff]
  %74 = vst [vmem:[%s71] sm:$0xff] %v73
  %s75 = scalar_lea.vmem %s2, 144
  %s76 = scalar_lea.vmem %s0, 144
  %v77 = vld [vmem:[%s76] sm:$0xff]
  %78 = vst [vmem:[%s75] sm:$0xff] %v77
  %s79 = scalar_lea.vmem %s2, 152
  %s80 = scalar_lea.vmem %s0, 152
  %v81 = vld [vmem:[%s80] sm:$0xff]
  %82 = vst [vmem:[%s79] sm:$0xff] %v81
  %s83 = scalar_lea.vmem %s2, 160
  %s84 = scalar_lea.vmem %s0, 160
  %v85 = vld [vmem:[%s84] sm:$0xff]
  %86 = vst [vmem:[%s83] sm:$0xff] %v85
  %s87 = scalar_lea.vmem %s2, 168
  %s88 = scalar_lea.vmem %s0, 168
  %v89 = vld [vmem:[%s88] sm:$0xff]
  %90 = vst [vmem:[%s87] sm:$0xff] %v89
  %s91 = scalar_lea.vmem %s2, 176
  %s92 = scalar_lea.vmem %s0, 176
  %v93 = vld [vmem:[%s92] sm:$0xff]
  %94 = vst [vmem:[%s91] sm:$0xff] %v93
  %s95 = scalar_lea.vmem %s2, 184
  %s96 = scalar_lea.vmem %s0, 184
  %v97 = vld [vmem:[%s96] sm:$0xff]
  %98 = vst [vmem:[%s95] sm:$0xff] %v97
  %s99 = scalar_lea.vmem %s0, 192
  %v100 = vld [vmem:[%s99] sm:$0x3f]
  %s101 = scalar_lea.vmem %s2, 192
  %vm102 = vcmask 1045504
  %103 = vst.msk [vmem:[%s101] sm:$0xff] %vm102, %v100
  %v104 = vld [vmem:[%s1] sm:$0xff]
  %105 = vst [vmem:[%s4] sm:$0xff] %v104
  %s106 = scalar_lea.vmem %s4, 8
  %s107 = scalar_lea.vmem %s1, 8
  %v108 = vld [vmem:[%s107] sm:$0xff]
  %109 = vst [vmem:[%s106] sm:$0xff] %v108
  %s110 = scalar_lea.vmem %s4, 16
  %s111 = scalar_lea.vmem %s1, 16
  %v112 = vld [vmem:[%s111] sm:$0xff]
  %113 = vst [vmem:[%s110] sm:$0xff] %v112
  %s114 = scalar_lea.vmem %s4, 24
  %s115 = scalar_lea.vmem %s1, 24
  %v116 = vld [vmem:[%s115] sm:$0xff]
  %117 = vst [vmem:[%s114] sm:$0xff] %v116
  %s118 = scalar_lea.vmem %s4, 32
  %s119 = scalar_lea.vmem %s1, 32
  %v120 = vld [vmem:[%s119] sm:$0xff]
  %121 = vst [vmem:[%s118] sm:$0xff] %v120
  %s122 = scalar_lea.vmem %s4, 40
  %s123 = scalar_lea.vmem %s1, 40
  %v124 = vld [vmem:[%s123] sm:$0xff]
  %125 = vst [vmem:[%s122] sm:$0xff] %v124
  %s126 = scalar_lea.vmem %s4, 48
  %s127 = scalar_lea.vmem %s1, 48
  %v128 = vld [vmem:[%s127] sm:$0xff]
  %129 = vst [vmem:[%s126] sm:$0xff] %v128
  %s130 = scalar_lea.vmem %s4, 56
  %s131 = scalar_lea.vmem %s1, 56
  %v132 = vld [vmem:[%s131] sm:$0xff]
  %133 = vst [vmem:[%s130] sm:$0xff] %v132
  %s134 = scalar_lea.vmem %s4, 64
  %s135 = scalar_lea.vmem %s1, 64
  %v136 = vld [vmem:[%s135] sm:$0xff]
  %137 = vst [vmem:[%s134] sm:$0xff] %v136
  %s138 = scalar_lea.vmem %s4, 72
  %s139 = scalar_lea.vmem %s1, 72
  %v140 = vld [vmem:[%s139] sm:$0xff]
  %141 = vst [vmem:[%s138] sm:$0xff] %v140
  %s142 = scalar_lea.vmem %s4, 80
  %s143 = scalar_lea.vmem %s1, 80
  %v144 = vld [vmem:[%s143] sm:$0xff]
  %145 = vst [vmem:[%s142] sm:$0xff] %v144
  %s146 = scalar_lea.vmem %s4, 88
  %s147 = scalar_lea.vmem %s1, 88
  %v148 = vld [vmem:[%s147] sm:$0xff]
  %149 = vst [vmem:[%s146] sm:$0xff] %v148
  %s150 = scalar_lea.vmem %s4, 96
  %s151 = scalar_lea.vmem %s1, 96
  %v152 = vld [vmem:[%s151] sm:$0xff]
  %153 = vst [vmem:[%s150] sm:$0xff] %v152
  %s154 = scalar_lea.vmem %s4, 104
  %s155 = scalar_lea.vmem %s1, 104
  %v156 = vld [vmem:[%s155] sm:$0xff]
  %157 = vst [vmem:[%s154] sm:$0xff] %v156
  %s158 = scalar_lea.vmem %s4, 112
  %s159 = scalar_lea.vmem %s1, 112
  %v160 = vld [vmem:[%s159] sm:$0xff]
  %161 = vst [vmem:[%s158] sm:$0xff] %v160
  %s162 = scalar_lea.vmem %s4, 120
  %s163 = scalar_lea.vmem %s1, 120
  %v164 = vld [vmem:[%s163] sm:$0xff]
  %165 = vst [vmem:[%s162] sm:$0xff] %v164
  %s166 = scalar_lea.vmem %s4, 128
  %s167 = scalar_lea.vmem %s1, 128
  %v168 = vld [vmem:[%s167] sm:$0xff]
  %169 = vst [vmem:[%s166] sm:$0xff] %v168
  %s170 = scalar_lea.vmem %s4, 136
  %s171 = scalar_lea.vmem %s1, 136
  %v172 = vld [vmem:[%s171] sm:$0xff]
  %173 = vst [vmem:[%s170] sm:$0xff] %v172
  %s174 = scalar_lea.vmem %s4, 144
  %s175 = scalar_lea.vmem %s1, 144
  %v176 = vld [vmem:[%s175] sm:$0xff]
  %177 = vst [vmem:[%s174] sm:$0xff] %v176
  %s178 = scalar_lea.vmem %s4, 152
  %s179 = scalar_lea.vmem %s1, 152
  %v180 = vld [vmem:[%s179] sm:$0xff]
  %181 = vst [vmem:[%s178] sm:$0xff] %v180
  %s182 = scalar_lea.vmem %s4, 160
  %s183 = scalar_lea.vmem %s1, 160
  %v184 = vld [vmem:[%s183] sm:$0xff]
  %185 = vst [vmem:[%s182] sm:$0xff] %v184
  %s186 = scalar_lea.vmem %s4, 168
  %s187 = scalar_lea.vmem %s1, 168
  %v188 = vld [vmem:[%s187] sm:$0xff]
  %189 = vst [vmem:[%s186] sm:$0xff] %v188
  %s190 = scalar_lea.vmem %s4, 176
  %s191 = scalar_lea.vmem %s1, 176
  %v192 = vld [vmem:[%s191] sm:$0xff]
  %193 = vst [vmem:[%s190] sm:$0xff] %v192
  %s194 = scalar_lea.vmem %s4, 184
  %s195 = scalar_lea.vmem %s1, 184
  %v196 = vld [vmem:[%s195] sm:$0xff]
  %197 = vst [vmem:[%s194] sm:$0xff] %v196
  %s198 = scalar_lea.vmem %s1, 192
  %v199 = vld [vmem:[%s198] sm:$0x3f]
  %s200 = scalar_lea.vmem %s4, 192
  %vm201 = vcmask 1045504
  %202 = vst.msk [vmem:[%s200] sm:$0xff] %vm201, %v199

// kernel: forward.1
$region0: #{forward.1}
  #allocation0 [shape = 'u32[]', space=smem, size = 0x4, offset = 0x4, fixed_abs, tag = 'smem constant byte address 0x4 - core index']
  #allocation1 [shape = 'u32[144,128]{1,0:T(1,128)}', space=vmem, size = 0x12000, scoped, tag = 'internal scratch']
  %s0 = inlined_call_operand.hbm [shape: f32[16,64], index: 0, kind: input, shape index: {}]
  %s1 = inlined_call_operand.hbm [shape: f32[64,256], index: 1, kind: input, shape index: {}]
  %s2 = inlined_call_operand.vmem [shape: f32[16,256], index: 2, kind: output, shape index: {}]
  %s3 = sld [smem:[#allocation0]]
  $region26: #{forward.1} parent=0
    _
  %s5 = ssub.s32 1, %s3
  %s6 = scalar_select 0, %s5, %s3
  $region1: #{forward.1} parent=0
    #allocation2 [shape = 'u8[8192]{0}', space=vmem, size = 0x2000, scoped, tag = 'input window, operand 0, single buffered']
    #allocation3 [shape = 's32[1]{0}', space=sflag, size = 0x4, scoped, tag = 'scoped memory for forward.1']
    #allocation4 [shape = 'u8[65536]{0}', space=vmem, size = 0x10000, scoped, tag = 'input window, operand 1, single buffered']
    #allocation5 [shape = 's32[1]{0}', space=sflag, size = 0x4, scoped, tag = 'scoped memory for forward.1']
    %7 = vsyncpa [#allocation3], 0
    %8 = vsyncpa [#allocation5], 0
    // Predicated region
    $region2: #{forward.1} parent=1 // pred_check
      _
    $region3: #{forward.1} parent=1 // pred_check_branch
      %10 = sbr.rel (0) target = $region5
    $region4: #{forward.1} parent=1 // pred_region
      %s12 = ssub.s32 256, 256
      %13 = vsyncadd [#allocation3], %s12
      %s14 = sshll.u32 [#allocation2], 4
      %s15 = int_to_ptr.vmem [resolvable:$true] %s14
      %20 = dma.hbm_to_vmem [thread:$0]  %s0, 256, %s15, [#allocation3], 128, 128, 8
    $region5: #{forward.1} parent=1 // pred_fallthru
      _
    // Predicated region
    $region6: #{forward.1} parent=1 // pred_check
      _
    $region7: #{forward.1} parent=1 // pred_check_branch
      %22 = sbr.rel (0) target = $region9
    $region8: #{forward.1} parent=1 // pred_region
      %s24 = ssub.s32 2048, 2048
      %25 = vsyncadd [#allocation5], %s24
      %s26 = sshll.u32 [#allocation4], 4
      %s27 = int_to_ptr.vmem [resolvable:$true] %s26
      %32 = dma.hbm_to_vmem [thread:$0]  %s1, 2048, %s27, [#allocation5], 256, 256, 16
    $region9: #{forward.1} parent=1 // pred_fallthru
      _
    // Predicated region
    $region10: #{forward.1} parent=1 // pred_check
      _
    $region11: #{forward.1} parent=1 // pred_check_branch
      %34 = sbr.rel (0) target = $region13
    $region12: #{forward.1} parent=1 // pred_region
      %35 = dma.done [#allocation3], 256
    $region13: #{forward.1} parent=1 // pred_fallthru
      _
    // Predicated region
    $region14: #{forward.1} parent=1 // pred_check
      _
    $region15: #{forward.1} parent=1 // pred_check_branch
      %37 = sbr.rel (0) target = $region17
    $region16: #{forward.1} parent=1 // pred_region
      %38 = dma.done [#allocation5], 2048
    $region17: #{forward.1} parent=1 // pred_fallthru
      _
    %v39 = vld [vmem:[#allocation2] sm:$0xff]
    %v40 = vld [vmem:[#allocation2 + $0x8] sm:$0xff]
    %v41 = vld [vmem:[#allocation4] sm:$0xff]
    %v42 = vld [vmem:[#allocation4 + $0x8] sm:$0xff]
    %v43 = vld [vmem:[#allocation4 + $0x10] sm:$0xff]
    %v44 = vld [vmem:[#allocation4 + $0x18] sm:$0xff]
    %v45 = vld [vmem:[#allocation4 + $0x20] sm:$0xff]
    %v46 = vld [vmem:[#allocation4 + $0x28] sm:$0xff]
    %v47 = vld [vmem:[#allocation4 + $0x30] sm:$0xff]
    %v48 = vld [vmem:[#allocation4 + $0x38] sm:$0xff]
    %v49 = vld [vmem:[#allocation4 + $0x40] sm:$0xff]
    %v50 = vld [vmem:[#allocation4 + $0x48] sm:$0xff]
    %v51 = vld [vmem:[#allocation4 + $0x50] sm:$0xff]
    %v52 = vld [vmem:[#allocation4 + $0x58] sm:$0xff]
    %v53 = vld [vmem:[#allocation4 + $0x60] sm:$0xff]
    %v54 = vld [vmem:[#allocation4 + $0x68] sm:$0xff]
    %v55 = vld [vmem:[#allocation4 + $0x70] sm:$0xff]
    %v56 = vld [vmem:[#allocation4 + $0x78] sm:$0xff]
    %vm57 = vcmask 523264
    %v59 = vsel %vm57, %v39, 0
    %v62 = vsel %vm57, %v40, 0
    %64 = vmatprep.subr.mxu0 0.0
    %65 = vmatpush1.msra.mxu0 0.0
    %66 = vmatprep.subr.mxu0 0.0
    %67 = vmatpush1.msra.mxu0 0.0
    %68 = vmatprep.subr.mxu0 0.0
    %69 = vmatpush1.msra.mxu0 0.0
    %70 = vmatprep.subr.mxu0 0.0
    %71 = vmatpush1.msra.mxu0 0.0
    %72 = vmatprep.subr.mxu0 0.0
    %73 = vmatpush1.msra.mxu0 0.0
    %74 = vmatprep.subr.mxu0 0.0
    %75 = vmatpush1.msra.mxu0 0.0
    %76 = vmatprep.subr.mxu0 0.0
    %77 = vmatpush1.msra.mxu0 0.0
    %78 = vmatprep.subr.mxu0 0.0
    %79 = vmatpush1.msra.mxu0 0.0
    %80 = vmatprep.subr.mxu0 %v56
    %81 = vmatpush1.msra.mxu0 %v55
    %82 = vmatprep.subr.mxu0 %v54
    %83 = vmatpush1.msra.mxu0 %v53
    %84 = vmatprep.subr.mxu0 %v52
    %85 = vmatpush1.msra.mxu0 %v51
    %86 = vmatprep.subr.mxu0 %v50
    %87 = vmatpush1.msra.mxu0 %v49
    %88 = vmatprep.subr.mxu0 %v48
    %89 = vmatpush1.msra.mxu0 %v47
    %90 = vmatprep.subr.mxu0 %v46
    %91 = vmatpush1.msra.mxu0 %v45
    %92 = vmatprep.subr.mxu0 %v44
    %93 = vmatpush1.msra.mxu0 %v43
    %94 = vmatprep.subr.mxu0 %v42
    %95 = vmatpush1.msra.mxu0 %v41
    %96 = vmatprep.subr.mxu0 0.0
    %97 = vmatpush2.msra.mxu0 0.0
    %98 = vmatprep.subr.mxu0 0.0
    %99 = vmatpush2.msra.mxu0 0.0
    %100 = vmatprep.subr.mxu0 0.0
    %101 = vmatpush2.msra.mxu0 0.0
    %102 = vmatprep.subr.mxu0 0.0
    %103 = vmatpush2.msra.mxu0 0.0
    %104 = vmatprep.subr.mxu0 0.0
    %105 = vmatpush2.msra.mxu0 0.0
    %106 = vmatprep.subr.mxu0 0.0
    %107 = vmatpush2.msra.mxu0 0.0
    %108 = vmatprep.subr.mxu0 0.0
    %109 = vmatpush2.msra.mxu0 0.0
    %110 = vmatprep.subr.mxu0 0.0
    %111 = vmatpush2.msra.mxu0 0.0
    %112 = vmatprep.subr.mxu0 0.0
    %113 = vmatpush2.msra.mxu0 0.0
    %114 = vmatprep.subr.mxu0 0.0
    %115 = vmatpush2.msra.mxu0 0.0
    %116 = vmatprep.subr.mxu0 0.0
    %117 = vmatpush2.msra.mxu0 0.0
    %118 = vmatprep.subr.mxu0 0.0
    %119 = vmatpush2.msra.mxu0 0.0
    %120 = vmatprep.subr.mxu0 0.0
    %121 = vmatpush2.msra.mxu0 0.0
    %122 = vmatprep.subr.mxu0 0.0
    %123 = vmatpush2.msra.mxu0 0.0
    %124 = vmatprep.subr.mxu0 0.0
    %125 = vmatpush2.msra.mxu0 0.0
    %126 = vmatprep.subr.mxu0 0.0
    %127 = vmatpush2.msra.mxu0 0.0
    %128 = vmatprep.mubr.f32.mxu0 0.0
    %129 = vmatmul.mubr.f32.gmra.mxu0 %v59
    %v130 = vpop.f32.mrf.mxu0
    %v131 = vadd.f32 0.0, %v130
    %v132 = vpop.f32.mrf.mxu0
    %v133 = vadd.f32 0.0, %v132
    %134 = vmatprep.mubr.f32.mxu0 0.0
    %135 = vmatmul.mubr.f32.gmra.mxu0 %v62
    %v136 = vpop.f32.mrf.mxu0
    %v137 = vadd.f32 0.0, %v136
    %v138 = vpop.f32.mrf.mxu0
    %v139 = vadd.f32 0.0, %v138
    %140 = vdwg.mxu0
    %141 = vst [vmem:[%s2] sm:$0xff] %v131
    %142 = vst [vmem:[%s2 + $0x8] sm:$0xff] %v133
    %143 = vst [vmem:[%s2 + $0x10] sm:$0xff] %v137
    %144 = vst [vmem:[%s2 + $0x18] sm:$0xff] %v139
    // Predicated region
    $region18: #{forward.1} parent=1 // pred_check
      _
    $region19: #{forward.1} parent=1 // pred_check_branch
      %146 = sbr.rel (0) target = $region21
    $region20: #{forward.1} parent=1 // pred_region
      _
    $region21: #{forward.1} parent=1 // pred_fallthru
      _
    // Predicated region
    $region22: #{forward.1} parent=1 // pred_check
      _
    $region23: #{forward.1} parent=1 // pred_check_branch
      %148 = sbr.rel (0) target = $region25
    $region24: #{forward.1} parent=1 // pred_region
      _
    $region25: #{forward.1} parent=1 // pred_fallthru
      _
    %149 = vsyncpa [#allocation3], 1
    %150 = vsyncpa [#allocation5], 1

</llo_original>
